<compile_context>
chip_gen: v6e
topology: v6e:2x2x1
jax: 0.10.0
libtpu: 0.0.40
codegen_flags: <defaults>
</compile_context>

<pallas_src>
import numpy as np
import jax
import jax.numpy as jnp
from jax.experimental import pallas as pl
from jax.experimental.pallas import tpu as pltpu

_EPS = 1e-5


# ------------------------------- kernel --------------------------------------
def _cnn_kernel(x_ref, w1_ref, v1_ref, w2_ref, v2_ref, w3_ref, v3_ref,
                wfc_ref, bfc_ref, out_ref):
    def bn_relu(h, g, s):
        # training-mode BatchNorm1d: per-feature batch stats, biased variance
        m = jnp.mean(h, axis=0, keepdims=True)
        v = jnp.mean((h - m) * (h - m), axis=0, keepdims=True)
        return jnp.maximum((h - m) * jax.lax.rsqrt(v + _EPS) * g + s, 0.0)

    def layer(h, w_ref, v_ref):
        # w_ref: (2, K, N) even/odd folded conv weights.
        # v_ref: (6, N) rows = [bias_e, bias_o, gamma_e, gamma_o, beta_e, beta_o]
        v = v_ref[...]
        be, bo = v[0:1, :], v[1:2, :]
        ge, go = v[2:3, :], v[3:4, :]
        se, so = v[4:5, :], v[5:6, :]
        he = jnp.dot(h, w_ref[0], preferred_element_type=jnp.float32) + be
        ho = jnp.dot(h, w_ref[1], preferred_element_type=jnp.float32) + bo
        # conv -> BN -> ReLU, then max_pool1d(2) == element-wise max of halves
        return jnp.maximum(bn_relu(he, ge, se), bn_relu(ho, go, so))

    h = x_ref[...]                       # (B, 11)
    h = layer(h, w1_ref, v1_ref)         # (B, 80)
    h = layer(h, w2_ref, v2_ref)         # (B, 64)
    h = layer(h, w3_ref, v3_ref)         # (B, 64)
    # fc (padded to 128 output lanes -> unmasked, lane-dense store)
    out_ref[...] = (jnp.dot(h, wfc_ref[...], preferred_element_type=jnp.float32)
                    + bfc_ref[...])      # (B, 128)


# --------------------- wrapper-side weight folding (plain JAX) ---------------
def _fold_params(p):
    f32 = jnp.float32
    w1, b1 = p["w1"].astype(f32), p["b1"].astype(f32)
    w2, b2 = p["w2"].astype(f32), p["b2"].astype(f32)
    w3, b3 = p["w3"].astype(f32), p["b3"].astype(f32)
    wfc, bfc = p["wfc"].astype(f32), p["bfc"].astype(f32)
    g1, be1 = p["g1"].astype(f32), p["be1"].astype(f32)
    g2, be2 = p["g2"].astype(f32), p["be2"].astype(f32)
    g3, be3 = p["g3"].astype(f32), p["be3"].astype(f32)

    # ---- conv1: Conv1d(1, 16, k=2) -> (11, 80) even / odd position halves ---
    # even-half column c*5+u corresponds to output (channel c, position 2u)
    c = np.repeat(np.arange(16), 5)
    u = np.tile(np.arange(5), 16)
    col = np.arange(80)
    w1e = (jnp.zeros((11, 80), f32)
           .at[2 * u, col].set(w1[c, 0, 0])
           .at[2 * u + 1, col].set(w1[c, 0, 1]))
    w1o = (jnp.zeros((11, 80), f32)
           .at[2 * u + 1, col].set(w1[c, 0, 0])
           .at[2 * u + 2, col].set(w1[c, 0, 1]))
    b1e = jnp.repeat(b1, 5)[None, :]
    g1e = g1.reshape(16, 10)[:, 0::2].reshape(1, 80)
    g1o = g1.reshape(16, 10)[:, 1::2].reshape(1, 80)
    s1e = be1.reshape(16, 10)[:, 0::2].reshape(1, 80)
    s1o = be1.reshape(16, 10)[:, 1::2].reshape(1, 80)
    w1s = jnp.stack([w1e, w1o])                                       # (2,11,80)
    v1 = jnp.concatenate([b1e, b1e, g1e, g1o, s1e, s1o], axis=0)      # (6,80)

    # ---- conv2: Conv1d(16, 32, k=2) -> (80, 64) even / odd halves -----------
    oo, uu, ii = np.meshgrid(np.arange(32), np.arange(2), np.arange(16),
                             indexing="ij")
    oo, uu, ii = oo.ravel(), uu.ravel(), ii.ravel()
    col2 = oo * 2 + uu
    r_e = ii * 5 + 2 * uu
    w2e = (jnp.zeros((80, 64), f32)
           .at[r_e, col2].set(w2[oo, ii, 0])
           .at[r_e + 1, col2].set(w2[oo, ii, 1]))
    w2o = (jnp.zeros((80, 64), f32)
           .at[r_e + 1, col2].set(w2[oo, ii, 0])
           .at[r_e + 2, col2].set(w2[oo, ii, 1]))
    b2e = jnp.repeat(b2, 2)[None, :]
    g2e = g2.reshape(32, 4)[:, 0::2].reshape(1, 64)
    g2o = g2.reshape(32, 4)[:, 1::2].reshape(1, 64)
    s2e = be2.reshape(32, 4)[:, 0::2].reshape(1, 64)
    s2o = be2.reshape(32, 4)[:, 1::2].reshape(1, 64)
    w2s = jnp.stack([w2e, w2o])                                       # (2,80,64)
    v2 = jnp.concatenate([b2e, b2e, g2e, g2o, s2e, s2o], axis=0)      # (6,64)

    # ---- conv3: Conv1d(32, 64, k=1) -> (64, 64) even / odd halves -----------
    o3, i3 = np.meshgrid(np.arange(64), np.arange(32), indexing="ij")
    o3, i3 = o3.ravel(), i3.ravel()
    w3e = jnp.zeros((64, 64), f32).at[2 * i3, o3].set(w3[o3, i3, 0])
    w3o = jnp.zeros((64, 64), f32).at[2 * i3 + 1, o3].set(w3[o3, i3, 0])
    b3e = b3[None, :]
    g3e = g3.reshape(64, 2)[:, 0][None, :]
    g3o = g3.reshape(64, 2)[:, 1][None, :]
    s3e = be3.reshape(64, 2)[:, 0][None, :]
    s3o = be3.reshape(64, 2)[:, 1][None, :]
    w3s = jnp.stack([w3e, w3o])                                       # (2,64,64)
    v3 = jnp.concatenate([b3e, b3e, g3e, g3o, s3e, s3o], axis=0)      # (6,64)

    # ---- fc: Linear(64, 2), padded to 128 lanes for a lane-dense store ------
    wfc_p = jnp.zeros((64, 128), f32).at[:, :2].set(wfc.T)
    bfc_p = jnp.zeros((1, 128), f32).at[0, :2].set(bfc)

    return (w1s, v1, w2s, v2, w3s, v3, wfc_p, bfc_p)


def cnn_forward_pallas(x_ncl, p):
    """x_ncl: (B, 1, 11) float32 -- same NCL layout PyTorch would receive."""
    B = x_ncl.shape[0]
    x2d = x_ncl[:, 0, :].astype(jnp.float32)          # (B, 11), 2D lane-dense
    args = (x2d,) + _fold_params(p)

    vmem = pl.BlockSpec(memory_space=pltpu.MemorySpace.VMEM)
    # TODO(synk): for large B, add a parallel batch grid axis; BN batch
    # statistics couple the batch, so that needs a two-pass scheme.
    out = pl.pallas_call(
        _cnn_kernel,
        out_shape=jax.ShapeDtypeStruct((B, 128), jnp.float32),
        in_specs=[vmem] * len(args),
        out_specs=vmem,
    )(*args)
    return out[:, :2]


# ----------------------------- pure-JAX reference ----------------------------
def cnn_forward_reference(x, p):
    def conv1d(h, w, b):
        out = jax.lax.conv_general_dilated(
            h, w, window_strides=(1,), padding="VALID",
            dimension_numbers=("NCH", "OIH", "NCH"),
            precision=jax.lax.Precision.HIGHEST)
        return out + b[None, :, None]

    def bn(h2, g, bt):
        m = h2.mean(0, keepdims=True)
        v = ((h2 - m) ** 2).mean(0, keepdims=True)
        return (h2 - m) / jnp.sqrt(v + _EPS) * g + bt

    def relu_pool(h):
        h = jnp.maximum(h, 0.0)
        B, C, L = h.shape
        return h.reshape(B, C, L // 2, 2).max(-1)

    h = conv1d(x, p["w1"], p["b1"])                                    # (B,16,10)
    h = bn(h.reshape(-1, 160), p["g1"], p["be1"]).reshape(-1, 16, 10)
    h = relu_pool(h)                                                   # (B,16,5)
    h = conv1d(h, p["w2"], p["b2"])                                    # (B,32,4)
    h = bn(h.reshape(-1, 128), p["g2"], p["be2"]).reshape(-1, 32, 4)
    h = relu_pool(h)                                                   # (B,32,2)
    h = conv1d(h, p["w3"], p["b3"])                                    # (B,64,2)
    h = bn(h.reshape(-1, 128), p["g3"], p["be3"]).reshape(-1, 64, 2)
    h = relu_pool(h)                                                   # (B,64,1)
    feat = h[:, :, 0]
    return jnp.dot(feat, p["wfc"].T, precision=jax.lax.Precision.HIGHEST) + p["bfc"]


if __name__ == "__main__":
    B = 4
    key = jax.random.PRNGKey(0)
    ks = jax.random.split(key, 9)

    # input: wine features, PyTorch shape (B, 1, 11)
    x = jax.random.normal(ks[0], (B, 1, 11), dtype=jnp.float32)

    params = {
        "w1":  jax.random.normal(ks[1], (16, 1, 2),  jnp.float32) / jnp.sqrt(2.0),
        "b1":  jax.random.normal(ks[2], (16,),       jnp.float32) * 0.1,
        "w2":  jax.random.normal(ks[3], (32, 16, 2), jnp.float32) / jnp.sqrt(32.0),
        "b2":  jax.random.normal(ks[4], (32,),       jnp.float32) * 0.1,
        "w3":  jax.random.normal(ks[5], (64, 32, 1), jnp.float32) / jnp.sqrt(32.0),
        "b3":  jax.random.normal(ks[6], (64,),       jnp.float32) * 0.1,
        "wfc": jax.random.normal(ks[7], (2, 64),     jnp.float32) / jnp.sqrt(64.0),
        "bfc": jax.random.normal(ks[8], (2,),        jnp.float32) * 0.1,
        # BatchNorm1d default init: weight = 1, bias = 0
        "g1": jnp.ones((160,), jnp.float32), "be1": jnp.zeros((160,), jnp.float32),
        "g2": jnp.ones((128,), jnp.float32), "be2": jnp.zeros((128,), jnp.float32),
        "g3": jnp.ones((128,), jnp.float32), "be3": jnp.zeros((128,), jnp.float32),
    }

    out = jax.block_until_ready(cnn_forward_pallas(x, params))
    ref = jax.block_until_ready(cnn_forward_reference(x, params))

    np.testing.assert_allclose(np.asarray(out), np.asarray(ref),
                               rtol=5e-2, atol=5e-2)
    assert out.shape == (B, 2)
    print("KERNEL_OK")
</pallas_src>

<mosaic_0001>
module attributes {stable_mosaic.version = 11 : i64} {
  func.func @_cnn_kernel(%arg0: memref<4x11xf32, #tpu.memory_space<vmem>>, %arg1: memref<2x11x80xf32, #tpu.memory_space<vmem>>, %arg2: memref<6x80xf32, #tpu.memory_space<vmem>>, %arg3: memref<2x80x64xf32, #tpu.memory_space<vmem>>, %arg4: memref<6x64xf32, #tpu.memory_space<vmem>>, %arg5: memref<2x64x64xf32, #tpu.memory_space<vmem>>, %arg6: memref<6x64xf32, #tpu.memory_space<vmem>>, %arg7: memref<64x128xf32, #tpu.memory_space<vmem>>, %arg8: memref<1x128xf32, #tpu.memory_space<vmem>>, %arg9: memref<4x128xf32, #tpu.memory_space<vmem>>) attributes {dimension_semantics = [], scalar_prefetch = 0 : i64, scratch_operands = 0 : i64, tpu.core_type = #tpu.core_type<tc>} {
    %c0 = arith.constant 0 : index
    %c0_0 = arith.constant 0 : index
    %0 = vector.load %arg0[%c0, %c0_0] : memref<4x11xf32, #tpu.memory_space<vmem>>, vector<4x11xf32>
    %c0_1 = arith.constant 0 : index
    %c0_2 = arith.constant 0 : index
    %1 = vector.load %arg2[%c0_1, %c0_2] : memref<6x80xf32, #tpu.memory_space<vmem>>, vector<6x80xf32>
    %2 = vector.extract_strided_slice %1 {offsets = [0, 0], sizes = [1, 80], strides = [1, 1]} : vector<6x80xf32> to vector<1x80xf32>
    %3 = vector.extract_strided_slice %1 {offsets = [1, 0], sizes = [1, 80], strides = [1, 1]} : vector<6x80xf32> to vector<1x80xf32>
    %4 = vector.extract_strided_slice %1 {offsets = [2, 0], sizes = [1, 80], strides = [1, 1]} : vector<6x80xf32> to vector<1x80xf32>
    %5 = vector.extract_strided_slice %1 {offsets = [3, 0], sizes = [1, 80], strides = [1, 1]} : vector<6x80xf32> to vector<1x80xf32>
    %6 = vector.extract_strided_slice %1 {offsets = [4, 0], sizes = [1, 80], strides = [1, 1]} : vector<6x80xf32> to vector<1x80xf32>
    %7 = vector.extract_strided_slice %1 {offsets = [5, 0], sizes = [1, 80], strides = [1, 1]} : vector<6x80xf32> to vector<1x80xf32>
    %c0_3 = arith.constant 0 : index
    %c0_4 = arith.constant 0 : index
    %c0_5 = arith.constant 0 : index
    %8 = vector.load %arg1[%c0_3, %c0_4, %c0_5] : memref<2x11x80xf32, #tpu.memory_space<vmem>>, vector<1x11x80xf32>
    %9 = vector.shape_cast %8 : vector<1x11x80xf32> to vector<11x80xf32>
    %cst = arith.constant dense<0.000000e+00> : vector<4x80xf32>
    %10 = tpu.matmul %0, %9, %cst {dimension_numbers = #tpu.dot_dimension_numbers<[1], [0], [0], [1], [0, 0, 1, 1], [], []>} : vector<4x11xf32>, vector<11x80xf32>, vector<4x80xf32> -> vector<4x80xf32>
    %11 = vector.broadcast %2 : vector<1x80xf32> to vector<4x80xf32>
    %12 = arith.addf %10, %11 : vector<4x80xf32>
    %c1 = arith.constant 1 : index
    %c0_6 = arith.constant 0 : index
    %c0_7 = arith.constant 0 : index
    %13 = vector.load %arg1[%c1, %c0_6, %c0_7] : memref<2x11x80xf32, #tpu.memory_space<vmem>>, vector<1x11x80xf32>
    %14 = vector.shape_cast %13 : vector<1x11x80xf32> to vector<11x80xf32>
    %cst_8 = arith.constant dense<0.000000e+00> : vector<4x80xf32>
    %15 = tpu.matmul %0, %14, %cst_8 {dimension_numbers = #tpu.dot_dimension_numbers<[1], [0], [0], [1], [0, 0, 1, 1], [], []>} : vector<4x11xf32>, vector<11x80xf32>, vector<4x80xf32> -> vector<4x80xf32>
    %16 = vector.broadcast %3 : vector<1x80xf32> to vector<4x80xf32>
    %17 = arith.addf %15, %16 : vector<4x80xf32>
    %cst_9 = arith.constant dense<0.000000e+00> : vector<80xf32>
    %18 = vector.multi_reduction <add>, %12, %cst_9 [0] : vector<4x80xf32> to vector<80xf32>
    %19 = vector.shape_cast %18 : vector<80xf32> to vector<1x80xf32>
    %cst_10 = arith.constant 4.000000e+00 : f32
    %20 = vector.broadcast %cst_10 : f32 to vector<1x80xf32>
    %21 = arith.divf %19, %20 : vector<1x80xf32>
    %22 = vector.broadcast %21 : vector<1x80xf32> to vector<4x80xf32>
    %23 = arith.subf %12, %22 : vector<4x80xf32>
    %24 = vector.broadcast %21 : vector<1x80xf32> to vector<4x80xf32>
    %25 = arith.subf %12, %24 : vector<4x80xf32>
    %26 = arith.mulf %23, %25 : vector<4x80xf32>
    %cst_11 = arith.constant dense<0.000000e+00> : vector<80xf32>
    %27 = vector.multi_reduction <add>, %26, %cst_11 [0] : vector<4x80xf32> to vector<80xf32>
    %28 = vector.shape_cast %27 : vector<80xf32> to vector<1x80xf32>
    %cst_12 = arith.constant 4.000000e+00 : f32
    %29 = vector.broadcast %cst_12 : f32 to vector<1x80xf32>
    %30 = arith.divf %28, %29 : vector<1x80xf32>
    %31 = vector.broadcast %21 : vector<1x80xf32> to vector<4x80xf32>
    %32 = arith.subf %12, %31 : vector<4x80xf32>
    %cst_13 = arith.constant 9.99999974E-6 : f32
    %33 = vector.broadcast %cst_13 : f32 to vector<1x80xf32>
    %34 = arith.addf %30, %33 : vector<1x80xf32>
    %35 = math.rsqrt %34 : vector<1x80xf32>
    %36 = vector.broadcast %35 : vector<1x80xf32> to vector<4x80xf32>
    %37 = arith.mulf %32, %36 : vector<4x80xf32>
    %38 = vector.broadcast %4 : vector<1x80xf32> to vector<4x80xf32>
    %39 = arith.mulf %37, %38 : vector<4x80xf32>
    %40 = vector.broadcast %6 : vector<1x80xf32> to vector<4x80xf32>
    %41 = arith.addf %39, %40 : vector<4x80xf32>
    %cst_14 = arith.constant 0.000000e+00 : f32
    %42 = vector.broadcast %cst_14 : f32 to vector<4x80xf32>
    %43 = arith.maximumf %41, %42 : vector<4x80xf32>
    %cst_15 = arith.constant dense<0.000000e+00> : vector<80xf32>
    %44 = vector.multi_reduction <add>, %17, %cst_15 [0] : vector<4x80xf32> to vector<80xf32>
    %45 = vector.shape_cast %44 : vector<80xf32> to vector<1x80xf32>
    %cst_16 = arith.constant 4.000000e+00 : f32
    %46 = vector.broadcast %cst_16 : f32 to vector<1x80xf32>
    %47 = arith.divf %45, %46 : vector<1x80xf32>
    %48 = vector.broadcast %47 : vector<1x80xf32> to vector<4x80xf32>
    %49 = arith.subf %17, %48 : vector<4x80xf32>
    %50 = vector.broadcast %47 : vector<1x80xf32> to vector<4x80xf32>
    %51 = arith.subf %17, %50 : vector<4x80xf32>
    %52 = arith.mulf %49, %51 : vector<4x80xf32>
    %cst_17 = arith.constant dense<0.000000e+00> : vector<80xf32>
    %53 = vector.multi_reduction <add>, %52, %cst_17 [0] : vector<4x80xf32> to vector<80xf32>
    %54 = vector.shape_cast %53 : vector<80xf32> to vector<1x80xf32>
    %cst_18 = arith.constant 4.000000e+00 : f32
    %55 = vector.broadcast %cst_18 : f32 to vector<1x80xf32>
    %56 = arith.divf %54, %55 : vector<1x80xf32>
    %57 = vector.broadcast %47 : vector<1x80xf32> to vector<4x80xf32>
    %58 = arith.subf %17, %57 : vector<4x80xf32>
    %cst_19 = arith.constant 9.99999974E-6 : f32
    %59 = vector.broadcast %cst_19 : f32 to vector<1x80xf32>
    %60 = arith.addf %56, %59 : vector<1x80xf32>
    %61 = math.rsqrt %60 : vector<1x80xf32>
    %62 = vector.broadcast %61 : vector<1x80xf32> to vector<4x80xf32>
    %63 = arith.mulf %58, %62 : vector<4x80xf32>
    %64 = vector.broadcast %5 : vector<1x80xf32> to vector<4x80xf32>
    %65 = arith.mulf %63, %64 : vector<4x80xf32>
    %66 = vector.broadcast %7 : vector<1x80xf32> to vector<4x80xf32>
    %67 = arith.addf %65, %66 : vector<4x80xf32>
    %cst_20 = arith.constant 0.000000e+00 : f32
    %68 = vector.broadcast %cst_20 : f32 to vector<4x80xf32>
    %69 = arith.maximumf %67, %68 : vector<4x80xf32>
    %70 = arith.maximumf %43, %69 : vector<4x80xf32>
    %c0_21 = arith.constant 0 : index
    %c0_22 = arith.constant 0 : index
    %71 = vector.load %arg4[%c0_21, %c0_22] : memref<6x64xf32, #tpu.memory_space<vmem>>, vector<6x64xf32>
    %72 = vector.extract_strided_slice %71 {offsets = [0, 0], sizes = [1, 64], strides = [1, 1]} : vector<6x64xf32> to vector<1x64xf32>
    %73 = vector.extract_strided_slice %71 {offsets = [1, 0], sizes = [1, 64], strides = [1, 1]} : vector<6x64xf32> to vector<1x64xf32>
    %74 = vector.extract_strided_slice %71 {offsets = [2, 0], sizes = [1, 64], strides = [1, 1]} : vector<6x64xf32> to vector<1x64xf32>
    %75 = vector.extract_strided_slice %71 {offsets = [3, 0], sizes = [1, 64], strides = [1, 1]} : vector<6x64xf32> to vector<1x64xf32>
    %76 = vector.extract_strided_slice %71 {offsets = [4, 0], sizes = [1, 64], strides = [1, 1]} : vector<6x64xf32> to vector<1x64xf32>
    %77 = vector.extract_strided_slice %71 {offsets = [5, 0], sizes = [1, 64], strides = [1, 1]} : vector<6x64xf32> to vector<1x64xf32>
    %c0_23 = arith.constant 0 : index
    %c0_24 = arith.constant 0 : index
    %c0_25 = arith.constant 0 : index
    %78 = vector.load %arg3[%c0_23, %c0_24, %c0_25] : memref<2x80x64xf32, #tpu.memory_space<vmem>>, vector<1x80x64xf32>
    %79 = vector.shape_cast %78 : vector<1x80x64xf32> to vector<80x64xf32>
    %cst_26 = arith.constant dense<0.000000e+00> : vector<4x64xf32>
    %80 = tpu.matmul %70, %79, %cst_26 {dimension_numbers = #tpu.dot_dimension_numbers<[1], [0], [0], [1], [0, 0, 1, 1], [], []>} : vector<4x80xf32>, vector<80x64xf32>, vector<4x64xf32> -> vector<4x64xf32>
    %81 = vector.broadcast %72 : vector<1x64xf32> to vector<4x64xf32>
    %82 = arith.addf %80, %81 : vector<4x64xf32>
    %c1_27 = arith.constant 1 : index
    %c0_28 = arith.constant 0 : index
    %c0_29 = arith.constant 0 : index
    %83 = vector.load %arg3[%c1_27, %c0_28, %c0_29] : memref<2x80x64xf32, #tpu.memory_space<vmem>>, vector<1x80x64xf32>
    %84 = vector.shape_cast %83 : vector<1x80x64xf32> to vector<80x64xf32>
    %cst_30 = arith.constant dense<0.000000e+00> : vector<4x64xf32>
    %85 = tpu.matmul %70, %84, %cst_30 {dimension_numbers = #tpu.dot_dimension_numbers<[1], [0], [0], [1], [0, 0, 1, 1], [], []>} : vector<4x80xf32>, vector<80x64xf32>, vector<4x64xf32> -> vector<4x64xf32>
    %86 = vector.broadcast %73 : vector<1x64xf32> to vector<4x64xf32>
    %87 = arith.addf %85, %86 : vector<4x64xf32>
    %cst_31 = arith.constant dense<0.000000e+00> : vector<64xf32>
    %88 = vector.multi_reduction <add>, %82, %cst_31 [0] : vector<4x64xf32> to vector<64xf32>
    %89 = vector.shape_cast %88 : vector<64xf32> to vector<1x64xf32>
    %cst_32 = arith.constant 4.000000e+00 : f32
    %90 = vector.broadcast %cst_32 : f32 to vector<1x64xf32>
    %91 = arith.divf %89, %90 : vector<1x64xf32>
    %92 = vector.broadcast %91 : vector<1x64xf32> to vector<4x64xf32>
    %93 = arith.subf %82, %92 : vector<4x64xf32>
    %94 = vector.broadcast %91 : vector<1x64xf32> to vector<4x64xf32>
    %95 = arith.subf %82, %94 : vector<4x64xf32>
    %96 = arith.mulf %93, %95 : vector<4x64xf32>
    %cst_33 = arith.constant dense<0.000000e+00> : vector<64xf32>
    %97 = vector.multi_reduction <add>, %96, %cst_33 [0] : vector<4x64xf32> to vector<64xf32>
    %98 = vector.shape_cast %97 : vector<64xf32> to vector<1x64xf32>
    %cst_34 = arith.constant 4.000000e+00 : f32
    %99 = vector.broadcast %cst_34 : f32 to vector<1x64xf32>
    %100 = arith.divf %98, %99 : vector<1x64xf32>
    %101 = vector.broadcast %91 : vector<1x64xf32> to vector<4x64xf32>
    %102 = arith.subf %82, %101 : vector<4x64xf32>
    %cst_35 = arith.constant 9.99999974E-6 : f32
    %103 = vector.broadcast %cst_35 : f32 to vector<1x64xf32>
    %104 = arith.addf %100, %103 : vector<1x64xf32>
    %105 = math.rsqrt %104 : vector<1x64xf32>
    %106 = vector.broadcast %105 : vector<1x64xf32> to vector<4x64xf32>
    %107 = arith.mulf %102, %106 : vector<4x64xf32>
    %108 = vector.broadcast %74 : vector<1x64xf32> to vector<4x64xf32>
    %109 = arith.mulf %107, %108 : vector<4x64xf32>
    %110 = vector.broadcast %76 : vector<1x64xf32> to vector<4x64xf32>
    %111 = arith.addf %109, %110 : vector<4x64xf32>
    %cst_36 = arith.constant 0.000000e+00 : f32
    %112 = vector.broadcast %cst_36 : f32 to vector<4x64xf32>
    %113 = arith.maximumf %111, %112 : vector<4x64xf32>
    %cst_37 = arith.constant dense<0.000000e+00> : vector<64xf32>
    %114 = vector.multi_reduction <add>, %87, %cst_37 [0] : vector<4x64xf32> to vector<64xf32>
    %115 = vector.shape_cast %114 : vector<64xf32> to vector<1x64xf32>
    %cst_38 = arith.constant 4.000000e+00 : f32
    %116 = vector.broadcast %cst_38 : f32 to vector<1x64xf32>
    %117 = arith.divf %115, %116 : vector<1x64xf32>
    %118 = vector.broadcast %117 : vector<1x64xf32> to vector<4x64xf32>
    %119 = arith.subf %87, %118 : vector<4x64xf32>
    %120 = vector.broadcast %117 : vector<1x64xf32> to vector<4x64xf32>
    %121 = arith.subf %87, %120 : vector<4x64xf32>
    %122 = arith.mulf %119, %121 : vector<4x64xf32>
    %cst_39 = arith.constant dense<0.000000e+00> : vector<64xf32>
    %123 = vector.multi_reduction <add>, %122, %cst_39 [0] : vector<4x64xf32> to vector<64xf32>
    %124 = vector.shape_cast %123 : vector<64xf32> to vector<1x64xf32>
    %cst_40 = arith.constant 4.000000e+00 : f32
    %125 = vector.broadcast %cst_40 : f32 to vector<1x64xf32>
    %126 = arith.divf %124, %125 : vector<1x64xf32>
    %127 = vector.broadcast %117 : vector<1x64xf32> to vector<4x64xf32>
    %128 = arith.subf %87, %127 : vector<4x64xf32>
    %cst_41 = arith.constant 9.99999974E-6 : f32
    %129 = vector.broadcast %cst_41 : f32 to vector<1x64xf32>
    %130 = arith.addf %126, %129 : vector<1x64xf32>
    %131 = math.rsqrt %130 : vector<1x64xf32>
    %132 = vector.broadcast %131 : vector<1x64xf32> to vector<4x64xf32>
    %133 = arith.mulf %128, %132 : vector<4x64xf32>
    %134 = vector.broadcast %75 : vector<1x64xf32> to vector<4x64xf32>
    %135 = arith.mulf %133, %134 : vector<4x64xf32>
    %136 = vector.broadcast %77 : vector<1x64xf32> to vector<4x64xf32>
    %137 = arith.addf %135, %136 : vector<4x64xf32>
    %cst_42 = arith.constant 0.000000e+00 : f32
    %138 = vector.broadcast %cst_42 : f32 to vector<4x64xf32>
    %139 = arith.maximumf %137, %138 : vector<4x64xf32>
    %140 = arith.maximumf %113, %139 : vector<4x64xf32>
    %c0_43 = arith.constant 0 : index
    %c0_44 = arith.constant 0 : index
    %141 = vector.load %arg6[%c0_43, %c0_44] : memref<6x64xf32, #tpu.memory_space<vmem>>, vector<6x64xf32>
    %142 = vector.extract_strided_slice %141 {offsets = [0, 0], sizes = [1, 64], strides = [1, 1]} : vector<6x64xf32> to vector<1x64xf32>
    %143 = vector.extract_strided_slice %141 {offsets = [1, 0], sizes = [1, 64], strides = [1, 1]} : vector<6x64xf32> to vector<1x64xf32>
    %144 = vector.extract_strided_slice %141 {offsets = [2, 0], sizes = [1, 64], strides = [1, 1]} : vector<6x64xf32> to vector<1x64xf32>
    %145 = vector.extract_strided_slice %141 {offsets = [3, 0], sizes = [1, 64], strides = [1, 1]} : vector<6x64xf32> to vector<1x64xf32>
    %146 = vector.extract_strided_slice %141 {offsets = [4, 0], sizes = [1, 64], strides = [1, 1]} : vector<6x64xf32> to vector<1x64xf32>
    %147 = vector.extract_strided_slice %141 {offsets = [5, 0], sizes = [1, 64], strides = [1, 1]} : vector<6x64xf32> to vector<1x64xf32>
    %c0_45 = arith.constant 0 : index
    %c0_46 = arith.constant 0 : index
    %c0_47 = arith.constant 0 : index
    %148 = vector.load %arg5[%c0_45, %c0_46, %c0_47] : memref<2x64x64xf32, #tpu.memory_space<vmem>>, vector<1x64x64xf32>
    %149 = vector.shape_cast %148 : vector<1x64x64xf32> to vector<64x64xf32>
    %cst_48 = arith.constant dense<0.000000e+00> : vector<4x64xf32>
    %150 = tpu.matmul %140, %149, %cst_48 {dimension_numbers = #tpu.dot_dimension_numbers<[1], [0], [0], [1], [0, 0, 1, 1], [], []>} : vector<4x64xf32>, vector<64x64xf32>, vector<4x64xf32> -> vector<4x64xf32>
    %151 = vector.broadcast %142 : vector<1x64xf32> to vector<4x64xf32>
    %152 = arith.addf %150, %151 : vector<4x64xf32>
    %c1_49 = arith.constant 1 : index
    %c0_50 = arith.constant 0 : index
    %c0_51 = arith.constant 0 : index
    %153 = vector.load %arg5[%c1_49, %c0_50, %c0_51] : memref<2x64x64xf32, #tpu.memory_space<vmem>>, vector<1x64x64xf32>
    %154 = vector.shape_cast %153 : vector<1x64x64xf32> to vector<64x64xf32>
    %cst_52 = arith.constant dense<0.000000e+00> : vector<4x64xf32>
    %155 = tpu.matmul %140, %154, %cst_52 {dimension_numbers = #tpu.dot_dimension_numbers<[1], [0], [0], [1], [0, 0, 1, 1], [], []>} : vector<4x64xf32>, vector<64x64xf32>, vector<4x64xf32> -> vector<4x64xf32>
    %156 = vector.broadcast %143 : vector<1x64xf32> to vector<4x64xf32>
    %157 = arith.addf %155, %156 : vector<4x64xf32>
    %cst_53 = arith.constant dense<0.000000e+00> : vector<64xf32>
    %158 = vector.multi_reduction <add>, %152, %cst_53 [0] : vector<4x64xf32> to vector<64xf32>
    %159 = vector.shape_cast %158 : vector<64xf32> to vector<1x64xf32>
    %cst_54 = arith.constant 4.000000e+00 : f32
    %160 = vector.broadcast %cst_54 : f32 to vector<1x64xf32>
    %161 = arith.divf %159, %160 : vector<1x64xf32>
    %162 = vector.broadcast %161 : vector<1x64xf32> to vector<4x64xf32>
    %163 = arith.subf %152, %162 : vector<4x64xf32>
    %164 = vector.broadcast %161 : vector<1x64xf32> to vector<4x64xf32>
    %165 = arith.subf %152, %164 : vector<4x64xf32>
    %166 = arith.mulf %163, %165 : vector<4x64xf32>
    %cst_55 = arith.constant dense<0.000000e+00> : vector<64xf32>
    %167 = vector.multi_reduction <add>, %166, %cst_55 [0] : vector<4x64xf32> to vector<64xf32>
    %168 = vector.shape_cast %167 : vector<64xf32> to vector<1x64xf32>
    %cst_56 = arith.constant 4.000000e+00 : f32
    %169 = vector.broadcast %cst_56 : f32 to vector<1x64xf32>
    %170 = arith.divf %168, %169 : vector<1x64xf32>
    %171 = vector.broadcast %161 : vector<1x64xf32> to vector<4x64xf32>
    %172 = arith.subf %152, %171 : vector<4x64xf32>
    %cst_57 = arith.constant 9.99999974E-6 : f32
    %173 = vector.broadcast %cst_57 : f32 to vector<1x64xf32>
    %174 = arith.addf %170, %173 : vector<1x64xf32>
    %175 = math.rsqrt %174 : vector<1x64xf32>
    %176 = vector.broadcast %175 : vector<1x64xf32> to vector<4x64xf32>
    %177 = arith.mulf %172, %176 : vector<4x64xf32>
    %178 = vector.broadcast %144 : vector<1x64xf32> to vector<4x64xf32>
    %179 = arith.mulf %177, %178 : vector<4x64xf32>
    %180 = vector.broadcast %146 : vector<1x64xf32> to vector<4x64xf32>
    %181 = arith.addf %179, %180 : vector<4x64xf32>
    %cst_58 = arith.constant 0.000000e+00 : f32
    %182 = vector.broadcast %cst_58 : f32 to vector<4x64xf32>
    %183 = arith.maximumf %181, %182 : vector<4x64xf32>
    %cst_59 = arith.constant dense<0.000000e+00> : vector<64xf32>
    %184 = vector.multi_reduction <add>, %157, %cst_59 [0] : vector<4x64xf32> to vector<64xf32>
    %185 = vector.shape_cast %184 : vector<64xf32> to vector<1x64xf32>
    %cst_60 = arith.constant 4.000000e+00 : f32
    %186 = vector.broadcast %cst_60 : f32 to vector<1x64xf32>
    %187 = arith.divf %185, %186 : vector<1x64xf32>
    %188 = vector.broadcast %187 : vector<1x64xf32> to vector<4x64xf32>
    %189 = arith.subf %157, %188 : vector<4x64xf32>
    %190 = vector.broadcast %187 : vector<1x64xf32> to vector<4x64xf32>
    %191 = arith.subf %157, %190 : vector<4x64xf32>
    %192 = arith.mulf %189, %191 : vector<4x64xf32>
    %cst_61 = arith.constant dense<0.000000e+00> : vector<64xf32>
    %193 = vector.multi_reduction <add>, %192, %cst_61 [0] : vector<4x64xf32> to vector<64xf32>
    %194 = vector.shape_cast %193 : vector<64xf32> to vector<1x64xf32>
    %cst_62 = arith.constant 4.000000e+00 : f32
    %195 = vector.broadcast %cst_62 : f32 to vector<1x64xf32>
    %196 = arith.divf %194, %195 : vector<1x64xf32>
    %197 = vector.broadcast %187 : vector<1x64xf32> to vector<4x64xf32>
    %198 = arith.subf %157, %197 : vector<4x64xf32>
    %cst_63 = arith.constant 9.99999974E-6 : f32
    %199 = vector.broadcast %cst_63 : f32 to vector<1x64xf32>
    %200 = arith.addf %196, %199 : vector<1x64xf32>
    %201 = math.rsqrt %200 : vector<1x64xf32>
    %202 = vector.broadcast %201 : vector<1x64xf32> to vector<4x64xf32>
    %203 = arith.mulf %198, %202 : vector<4x64xf32>
    %204 = vector.broadcast %145 : vector<1x64xf32> to vector<4x64xf32>
    %205 = arith.mulf %203, %204 : vector<4x64xf32>
    %206 = vector.broadcast %147 : vector<1x64xf32> to vector<4x64xf32>
    %207 = arith.addf %205, %206 : vector<4x64xf32>
    %cst_64 = arith.constant 0.000000e+00 : f32
    %208 = vector.broadcast %cst_64 : f32 to vector<4x64xf32>
    %209 = arith.maximumf %207, %208 : vector<4x64xf32>
    %210 = arith.maximumf %183, %209 : vector<4x64xf32>
    %c0_65 = arith.constant 0 : index
    %c0_66 = arith.constant 0 : index
    %211 = vector.load %arg7[%c0_65, %c0_66] : memref<64x128xf32, #tpu.memory_space<vmem>>, vector<64x128xf32>
    %cst_67 = arith.constant dense<0.000000e+00> : vector<4x128xf32>
    %212 = tpu.matmul %210, %211, %cst_67 {dimension_numbers = #tpu.dot_dimension_numbers<[1], [0], [0], [1], [0, 0, 1, 1], [], []>} : vector<4x64xf32>, vector<64x128xf32>, vector<4x128xf32> -> vector<4x128xf32>
    %c0_68 = arith.constant 0 : index
    %c0_69 = arith.constant 0 : index
    %213 = vector.load %arg8[%c0_68, %c0_69] : memref<1x128xf32, #tpu.memory_space<vmem>>, vector<1x128xf32>
    %214 = vector.broadcast %213 : vector<1x128xf32> to vector<4x128xf32>
    %215 = arith.addf %212, %214 : vector<4x128xf32>
    %c0_70 = arith.constant 0 : index
    %c0_71 = arith.constant 0 : index
    %216 = vector.load %arg9[%c0_70, %c0_71] : memref<4x128xf32, #tpu.memory_space<vmem>>, vector<4x128xf32>
    tpu.vector_store %arg9[%c0_70, %c0_71], %215 {strides = array<i32>} : memref<4x128xf32, #tpu.memory_space<vmem>>, vector<4x128xf32>,
    return
  }
}

</mosaic_0001>

<llo_original>
// kernel: tpu_custom_call.1
$region0: #{tpu_custom_call.1}
  #allocation0 [shape = 'u32[]', space=smem, size = 0x4, offset = 0x4, fixed_abs, tag = 'smem constant byte address 0x4 - core index']
  #allocation1 [shape = 'u32[144,128]{1,0:T(1,128)}', space=vmem, size = 0x12000, scoped, tag = 'internal scratch']
  %s0 = inlined_call_operand.vmem [shape: f32[4,11], index: 0, kind: input, shape index: {}]
  %s1 = inlined_call_operand.vmem [shape: f32[2,11,80], index: 1, kind: input, shape index: {}]
  %s2 = inlined_call_operand.vmem [shape: f32[6,80], index: 2, kind: input, shape index: {}]
  %s3 = inlined_call_operand.vmem [shape: f32[2,80,64], index: 3, kind: input, shape index: {}]
  %s4 = inlined_call_operand.vmem [shape: f32[6,64], index: 4, kind: input, shape index: {}]
  %s5 = inlined_call_operand.vmem [shape: f32[2,64,64], index: 5, kind: input, shape index: {}]
  %s6 = inlined_call_operand.vmem [shape: f32[6,64], index: 6, kind: input, shape index: {}]
  %s7 = inlined_call_operand.vmem [shape: f32[64,128], index: 7, kind: input, shape index: {}]
  %s8 = inlined_call_operand.vmem [shape: f32[1,128], index: 8, kind: input, shape index: {}]
  %s9 = inlined_call_operand.hbm [shape: f32[4,128], index: 9, kind: output, shape index: {}]
  %s10 = sld [smem:[#allocation0]]
  $region46: #{tpu_custom_call.1} parent=0
    _
  %s12 = ssub.s32 1, %s10
  %s13 = scalar_select 0, %s12, %s10
  $region1: #{tpu_custom_call.1} parent=0
    #allocation2 [shape = 'u8[2048]{0}', space=vmem, size = 0x800, scoped, tag = 'output window, operand 0, single buffered']
    #allocation3 [shape = 's32[1]{0}', space=sflag, size = 0x4, scoped, tag = 'scoped memory for tpu_custom_call.1']
    %14 = vsyncpa [#allocation3], 0
    // Predicated region
    $region2: #{tpu_custom_call.1} parent=1 // pred_check
      _
    $region3: #{tpu_custom_call.1} parent=1 // pred_check_branch
      %16 = sbr.rel (0) target = $region5
    $region4: #{tpu_custom_call.1} parent=1 // pred_region
      _
    $region5: #{tpu_custom_call.1} parent=1 // pred_fallthru
      _
    // Predicated region
    $region6: #{tpu_custom_call.1} parent=1 // pred_check
      _
    $region7: #{tpu_custom_call.1} parent=1 // pred_check_branch
      %18 = sbr.rel (0) target = $region9
    $region8: #{tpu_custom_call.1} parent=1 // pred_region
      _
    $region9: #{tpu_custom_call.1} parent=1 // pred_fallthru
      _
    // Predicated region
    $region10: #{tpu_custom_call.1} parent=1 // pred_check
      _
    $region11: #{tpu_custom_call.1} parent=1 // pred_check_branch
      %20 = sbr.rel (0) target = $region13
    $region12: #{tpu_custom_call.1} parent=1 // pred_region
      _
    $region13: #{tpu_custom_call.1} parent=1 // pred_fallthru
      _
    // Predicated region
    $region14: #{tpu_custom_call.1} parent=1 // pred_check
      _
    $region15: #{tpu_custom_call.1} parent=1 // pred_check_branch
      %22 = sbr.rel (0) target = $region17
    $region16: #{tpu_custom_call.1} parent=1 // pred_region
      _
    $region17: #{tpu_custom_call.1} parent=1 // pred_fallthru
      _
    // Predicated region
    $region18: #{tpu_custom_call.1} parent=1 // pred_check
      _
    $region19: #{tpu_custom_call.1} parent=1 // pred_check_branch
      %24 = sbr.rel (0) target = $region21
    $region20: #{tpu_custom_call.1} parent=1 // pred_region
      _
    $region21: #{tpu_custom_call.1} parent=1 // pred_fallthru
      _
    // Predicated region
    $region22: #{tpu_custom_call.1} parent=1 // pred_check
      _
    $region23: #{tpu_custom_call.1} parent=1 // pred_check_branch
      %26 = sbr.rel (0) target = $region25
    $region24: #{tpu_custom_call.1} parent=1 // pred_region
      _
    $region25: #{tpu_custom_call.1} parent=1 // pred_fallthru
      _
    // Predicated region
    $region26: #{tpu_custom_call.1} parent=1 // pred_check
      _
    $region27: #{tpu_custom_call.1} parent=1 // pred_check_branch
      %28 = sbr.rel (0) target = $region29
    $region28: #{tpu_custom_call.1} parent=1 // pred_region
      _
    $region29: #{tpu_custom_call.1} parent=1 // pred_fallthru
      _
    // Predicated region
    $region30: #{tpu_custom_call.1} parent=1 // pred_check
      _
    $region31: #{tpu_custom_call.1} parent=1 // pred_check_branch
      %30 = sbr.rel (0) target = $region33
    $region32: #{tpu_custom_call.1} parent=1 // pred_region
      _
    $region33: #{tpu_custom_call.1} parent=1 // pred_fallthru
      _
    // Predicated region
    $region34: #{tpu_custom_call.1} parent=1 // pred_check
      _
    $region35: #{tpu_custom_call.1} parent=1 // pred_check_branch
      %32 = sbr.rel (0) target = $region37
    $region36: #{tpu_custom_call.1} parent=1 // pred_region
      _
    $region37: #{tpu_custom_call.1} parent=1 // pred_fallthru
      _
    %v33 = vld [vmem:[%s0] sm:$0xf]
    %v34 = vld [vmem:[%s2] sm:$0x3f]
    %v35 = vld [vmem:[%s1] sm:$0xff]
    %v36 = vld [vmem:[%s1 + $0x8] sm:$0x7]
    %v37 = vlaneseq
    %v38 = vshrl.u32 %v37, 7
    %v39 = vsub.s32 0, %v38
    %v40 = vrot.slane %v34, %v39
    %vm41 = vcmask 89088
    %v43 = vsel %vm41, %v33, 0
    %vm45 = vcmask 1042432
    %v47 = vsel %vm45, %v36, 0
    %49 = vmatprep.subr.mxu0 0.0
    %50 = vmatpush1.msra.mxu0 0.0
    %51 = vmatprep.subr.mxu0 0.0
    %52 = vmatpush1.msra.mxu0 0.0
    %53 = vmatprep.subr.mxu0 0.0
    %54 = vmatpush1.msra.mxu0 0.0
    %55 = vmatprep.subr.mxu0 0.0
    %56 = vmatpush1.msra.mxu0 0.0
    %57 = vmatprep.subr.mxu0 0.0
    %58 = vmatpush1.msra.mxu0 0.0
    %59 = vmatprep.subr.mxu0 0.0
    %60 = vmatpush1.msra.mxu0 0.0
    %61 = vmatprep.subr.mxu0 0.0
    %62 = vmatpush1.msra.mxu0 0.0
    %63 = vmatprep.subr.mxu0 0.0
    %64 = vmatpush1.msra.mxu0 0.0
    %65 = vmatprep.subr.mxu0 0.0
    %66 = vmatpush1.msra.mxu0 0.0
    %67 = vmatprep.subr.mxu0 0.0
    %68 = vmatpush1.msra.mxu0 0.0
    %69 = vmatprep.subr.mxu0 0.0
    %70 = vmatpush1.msra.mxu0 0.0
    %71 = vmatprep.subr.mxu0 0.0
    %72 = vmatpush1.msra.mxu0 0.0
    %73 = vmatprep.subr.mxu0 0.0
    %74 = vmatpush1.msra.mxu0 0.0
    %75 = vmatprep.subr.mxu0 0.0
    %76 = vmatpush1.msra.mxu0 0.0
    %77 = vmatprep.subr.mxu0 0.0
    %78 = vmatpush1.msra.mxu0 %v47
    %79 = vmatprep.subr.mxu0 0.0
    %80 = vmatpush1.msra.mxu0 %v35
    %81 = vmatprep.subr.mxu0 0.0
    %82 = vmatpush2.msra.mxu0 0.0
    %83 = vmatprep.subr.mxu0 0.0
    %84 = vmatpush2.msra.mxu0 0.0
    %85 = vmatprep.subr.mxu0 0.0
    %86 = vmatpush2.msra.mxu0 0.0
    %87 = vmatprep.subr.mxu0 0.0
    %88 = vmatpush2.msra.mxu0 0.0
    %89 = vmatprep.subr.mxu0 0.0
    %90 = vmatpush2.msra.mxu0 0.0
    %91 = vmatprep.subr.mxu0 0.0
    %92 = vmatpush2.msra.mxu0 0.0
    %93 = vmatprep.subr.mxu0 0.0
    %94 = vmatpush2.msra.mxu0 0.0
    %95 = vmatprep.subr.mxu0 0.0
    %96 = vmatpush2.msra.mxu0 0.0
    %97 = vmatprep.subr.mxu0 0.0
    %98 = vmatpush2.msra.mxu0 0.0
    %99 = vmatprep.subr.mxu0 0.0
    %100 = vmatpush2.msra.mxu0 0.0
    %101 = vmatprep.subr.mxu0 0.0
    %102 = vmatpush2.msra.mxu0 0.0
    %103 = vmatprep.subr.mxu0 0.0
    %104 = vmatpush2.msra.mxu0 0.0
    %105 = vmatprep.subr.mxu0 0.0
    %106 = vmatpush2.msra.mxu0 0.0
    %107 = vmatprep.subr.mxu0 0.0
    %108 = vmatpush2.msra.mxu0 0.0
    %109 = vmatprep.subr.mxu0 0.0
    %110 = vmatpush2.msra.mxu0 0.0
    %111 = vmatprep.subr.mxu0 0.0
    %112 = vmatpush2.msra.mxu0 0.0
    %113 = vmatprep.mubr.f32.mxu0 0.0
    %114 = vmatmul.mubr.f32.gmra.mxu0 %v43
    %v115 = vpop.f32.mrf.mxu0
    %v116 = vadd.f32 %v40, %v115
    %v117 = vpop.f32.mrf.mxu0
    %118 = vdwg.mxu0
    %s119 = scalar_lea.vmem %s1, 16
    %v120 = vld [vmem:[%s119] sm:$0xff]
    %v121 = vld [vmem:[%s119 + $0x8] sm:$0x7]
    %v122 = vlaneseq
    %v123 = vshrl.u32 %v122, 7
    %v124 = vsub.s32 1, %v123
    %v125 = vrot.slane %v34, %v124
    %v127 = vsel %vm45, %v121, 0
    %129 = vmatprep.subr.mxu0 0.0
    %130 = vmatpush1.msra.mxu0 0.0
    %131 = vmatprep.subr.mxu0 0.0
    %132 = vmatpush1.msra.mxu0 0.0
    %133 = vmatprep.subr.mxu0 0.0
    %134 = vmatpush1.msra.mxu0 0.0
    %135 = vmatprep.subr.mxu0 0.0
    %136 = vmatpush1.msra.mxu0 0.0
    %137 = vmatprep.subr.mxu0 0.0
    %138 = vmatpush1.msra.mxu0 0.0
    %139 = vmatprep.subr.mxu0 0.0
    %140 = vmatpush1.msra.mxu0 0.0
    %141 = vmatprep.subr.mxu0 0.0
    %142 = vmatpush1.msra.mxu0 0.0
    %143 = vmatprep.subr.mxu0 0.0
    %144 = vmatpush1.msra.mxu0 0.0
    %145 = vmatprep.subr.mxu0 0.0
    %146 = vmatpush1.msra.mxu0 0.0
    %147 = vmatprep.subr.mxu0 0.0
    %148 = vmatpush1.msra.mxu0 0.0
    %149 = vmatprep.subr.mxu0 0.0
    %150 = vmatpush1.msra.mxu0 0.0
    %151 = vmatprep.subr.mxu0 0.0
    %152 = vmatpush1.msra.mxu0 0.0
    %153 = vmatprep.subr.mxu0 0.0
    %154 = vmatpush1.msra.mxu0 0.0
    %155 = vmatprep.subr.mxu0 0.0
    %156 = vmatpush1.msra.mxu0 0.0
    %157 = vmatprep.subr.mxu0 0.0
    %158 = vmatpush1.msra.mxu0 %v127
    %159 = vmatprep.subr.mxu0 0.0
    %160 = vmatpush1.msra.mxu0 %v120
    %161 = vmatprep.subr.mxu0 0.0
    %162 = vmatpush2.msra.mxu0 0.0
    %163 = vmatprep.subr.mxu0 0.0
    %164 = vmatpush2.msra.mxu0 0.0
    %165 = vmatprep.subr.mxu0 0.0
    %166 = vmatpush2.msra.mxu0 0.0
    %167 = vmatprep.subr.mxu0 0.0
    %168 = vmatpush2.msra.mxu0 0.0
    %169 = vmatprep.subr.mxu0 0.0
    %170 = vmatpush2.msra.mxu0 0.0
    %171 = vmatprep.subr.mxu0 0.0
    %172 = vmatpush2.msra.mxu0 0.0
    %173 = vmatprep.subr.mxu0 0.0
    %174 = vmatpush2.msra.mxu0 0.0
    %175 = vmatprep.subr.mxu0 0.0
    %176 = vmatpush2.msra.mxu0 0.0
    %177 = vmatprep.subr.mxu0 0.0
    %178 = vmatpush2.msra.mxu0 0.0
    %179 = vmatprep.subr.mxu0 0.0
    %180 = vmatpush2.msra.mxu0 0.0
    %181 = vmatprep.subr.mxu0 0.0
    %182 = vmatpush2.msra.mxu0 0.0
    %183 = vmatprep.subr.mxu0 0.0
    %184 = vmatpush2.msra.mxu0 0.0
    %185 = vmatprep.subr.mxu0 0.0
    %186 = vmatpush2.msra.mxu0 0.0
    %187 = vmatprep.subr.mxu0 0.0
    %188 = vmatpush2.msra.mxu0 0.0
    %189 = vmatprep.subr.mxu0 0.0
    %190 = vmatpush2.msra.mxu0 0.0
    %191 = vmatprep.subr.mxu0 0.0
    %192 = vmatpush2.msra.mxu0 0.0
    %193 = vmatprep.mubr.f32.mxu0 0.0
    %194 = vmatmul.mubr.f32.gmra.mxu0 %v43
    %v195 = vpop.f32.mrf.mxu0
    %v196 = vadd.f32 %v125, %v195
    %v197 = vpop.f32.mrf.mxu0
    %198 = vdwg.mxu0
    %vm199 = vcmask 650240
    %v200 = vsel %vm199, %v116, 0.0
    %v201 = vrot.slane %v200, 4
    %v202 = vadd.f32 %v200, %v201
    %v203 = vrot.slane %v202, 2
    %v204 = vadd.f32 %v202, %v203
    %v205 = vrot.slane %v204, 1
    %v206 = vadd.f32 %v204, %v205
    %v207 = vrcp.pop 4.0
    %v208 = vmul.f32 %v206, %v207
    %v209 = vsub.f32 %v116, %v208
    %v210 = vmul.f32 %v209, %v209
    %v211 = vsel %vm199, %v210, 0.0
    %v212 = vrot.slane %v211, 4
    %v213 = vadd.f32 %v211, %v212
    %v214 = vrot.slane %v213, 2
    %v215 = vadd.f32 %v213, %v214
    %v216 = vrot.slane %v215, 1
    %v217 = vadd.f32 %v215, %v216
    %v218 = vmul.f32 %v217, %v207
    %v219 = vadd.f32 %v218, 1e-05
    %v220 = vrsqrt.pop %v219
    %v221 = vmul.f32 %v209, %v220
    %v222 = vlaneseq
    %v223 = vshrl.u32 %v222, 7
    %v224 = vsub.s32 2, %v223
    %v225 = vrot.slane %v34, %v224
    %v226 = vmul.f32 %v221, %v225
    %v227 = vlaneseq
    %v228 = vshrl.u32 %v227, 7
    %v229 = vsub.s32 4, %v228
    %v230 = vrot.slane %v34, %v229
    %v231 = vadd.f32 %v226, %v230
    %v232 = vmax.f32 %v231, 0.0
    %v233 = vsel %vm199, %v196, 0.0
    %v234 = vrot.slane %v233, 4
    %v235 = vadd.f32 %v233, %v234
    %v236 = vrot.slane %v235, 2
    %v237 = vadd.f32 %v235, %v236
    %v238 = vrot.slane %v237, 1
    %v239 = vadd.f32 %v237, %v238
    %v240 = vmul.f32 %v239, %v207
    %v241 = vsub.f32 %v196, %v240
    %v242 = vmul.f32 %v241, %v241
    %v243 = vsel %vm199, %v242, 0.0
    %v244 = vrot.slane %v243, 4
    %v245 = vadd.f32 %v243, %v244
    %v246 = vrot.slane %v245, 2
    %v247 = vadd.f32 %v245, %v246
    %v248 = vrot.slane %v247, 1
    %v249 = vadd.f32 %v247, %v248
    %v250 = vmul.f32 %v249, %v207
    %v251 = vadd.f32 %v250, 1e-05
    %v252 = vrsqrt.pop %v251
    %v253 = vmul.f32 %v241, %v252
    %v254 = vlaneseq
    %v255 = vshrl.u32 %v254, 7
    %v256 = vsub.s32 3, %v255
    %v257 = vrot.slane %v34, %v256
    %v258 = vmul.f32 %v253, %v257
    %v259 = vlaneseq
    %v260 = vshrl.u32 %v259, 7
    %v261 = vsub.s32 5, %v260
    %v262 = vrot.slane %v34, %v261
    %v263 = vadd.f32 %v258, %v262
    %v264 = vmax.f32 %v263, 0.0
    %v265 = vmax.f32 %v232, %v264
    %v266 = vld [vmem:[%s4] sm:$0x3f]
    %v267 = vld [vmem:[%s3] sm:$0xff]
    %v268 = vld [vmem:[%s3 + $0x8] sm:$0xff]
    %v269 = vld [vmem:[%s3 + $0x10] sm:$0xff]
    %v270 = vld [vmem:[%s3 + $0x18] sm:$0xff]
    %v271 = vld [vmem:[%s3 + $0x20] sm:$0xff]
    %v272 = vld [vmem:[%s3 + $0x28] sm:$0xff]
    %v273 = vld [vmem:[%s3 + $0x30] sm:$0xff]
    %v274 = vld [vmem:[%s3 + $0x38] sm:$0xff]
    %v275 = vld [vmem:[%s3 + $0x40] sm:$0xff]
    %v276 = vld [vmem:[%s3 + $0x48] sm:$0xff]
    %v277 = vlaneseq
    %v278 = vshrl.u32 %v277, 7
    %v279 = vsub.s32 0, %v278
    %v280 = vrot.slane %v266, %v279
    %vm281 = vcmask 654336
    %v283 = vsel %vm281, %v265, 0
    %285 = vmatprep.subr.mxu0 0.0
    %286 = vmatpush1.msra.mxu0 0.0
    %287 = vmatprep.subr.mxu0 0.0
    %288 = vmatpush1.msra.mxu0 0.0
    %289 = vmatprep.subr.mxu0 0.0
    %290 = vmatpush1.msra.mxu0 0.0
    %291 = vmatprep.subr.mxu0 0.0
    %292 = vmatpush1.msra.mxu0 0.0
    %293 = vmatprep.subr.mxu0 0.0
    %294 = vmatpush1.msra.mxu0 0.0
    %295 = vmatprep.subr.mxu0 0.0
    %296 = vmatpush1.msra.mxu0 0.0
    %297 = vmatprep.subr.mxu0 0.0
    %298 = vmatpush1.msra.mxu0 %v276
    %299 = vmatprep.subr.mxu0 0.0
    %300 = vmatpush1.msra.mxu0 %v275
    %301 = vmatprep.subr.mxu0 0.0
    %302 = vmatpush1.msra.mxu0 %v274
    %303 = vmatprep.subr.mxu0 0.0
    %304 = vmatpush1.msra.mxu0 %v273
    %305 = vmatprep.subr.mxu0 0.0
    %306 = vmatpush1.msra.mxu0 %v272
    %307 = vmatprep.subr.mxu0 0.0
    %308 = vmatpush1.msra.mxu0 %v271
    %309 = vmatprep.subr.mxu0 0.0
    %310 = vmatpush1.msra.mxu0 %v270
    %311 = vmatprep.subr.mxu0 0.0
    %312 = vmatpush1.msra.mxu0 %v269
    %313 = vmatprep.subr.mxu0 0.0
    %314 = vmatpush1.msra.mxu0 %v268
    %315 = vmatprep.subr.mxu0 0.0
    %316 = vmatpush1.msra.mxu0 %v267
    %317 = vmatprep.subr.mxu0 0.0
    %318 = vmatpush2.msra.mxu0 0.0
    %319 = vmatprep.subr.mxu0 0.0
    %320 = vmatpush2.msra.mxu0 0.0
    %321 = vmatprep.subr.mxu0 0.0
    %322 = vmatpush2.msra.mxu0 0.0
    %323 = vmatprep.subr.mxu0 0.0
    %324 = vmatpush2.msra.mxu0 0.0
    %325 = vmatprep.subr.mxu0 0.0
    %326 = vmatpush2.msra.mxu0 0.0
    %327 = vmatprep.subr.mxu0 0.0
    %328 = vmatpush2.msra.mxu0 0.0
    %329 = vmatprep.subr.mxu0 0.0
    %330 = vmatpush2.msra.mxu0 0.0
    %331 = vmatprep.subr.mxu0 0.0
    %332 = vmatpush2.msra.mxu0 0.0
    %333 = vmatprep.subr.mxu0 0.0
    %334 = vmatpush2.msra.mxu0 0.0
    %335 = vmatprep.subr.mxu0 0.0
    %336 = vmatpush2.msra.mxu0 0.0
    %337 = vmatprep.subr.mxu0 0.0
    %338 = vmatpush2.msra.mxu0 0.0
    %339 = vmatprep.subr.mxu0 0.0
    %340 = vmatpush2.msra.mxu0 0.0
    %341 = vmatprep.subr.mxu0 0.0
    %342 = vmatpush2.msra.mxu0 0.0
    %343 = vmatprep.subr.mxu0 0.0
    %344 = vmatpush2.msra.mxu0 0.0
    %345 = vmatprep.subr.mxu0 0.0
    %346 = vmatpush2.msra.mxu0 0.0
    %347 = vmatprep.subr.mxu0 0.0
    %348 = vmatpush2.msra.mxu0 0.0
    %349 = vmatprep.mubr.f32.mxu0 0.0
    %350 = vmatmul.mubr.f32.gmra.mxu0 %v283
    %v351 = vpop.f32.mrf.mxu0
    %v352 = vadd.f32 %v280, %v351
    %v353 = vpop.f32.mrf.mxu0
    %354 = vdwg.mxu0
    %s355 = scalar_lea.vmem %s3, 80
    %v356 = vld [vmem:[%s355] sm:$0xff]
    %v357 = vld [vmem:[%s355 + $0x8] sm:$0xff]
    %v358 = vld [vmem:[%s355 + $0x10] sm:$0xff]
    %v359 = vld [vmem:[%s355 + $0x18] sm:$0xff]
    %v360 = vld [vmem:[%s355 + $0x20] sm:$0xff]
    %v361 = vld [vmem:[%s355 + $0x28] sm:$0xff]
    %v362 = vld [vmem:[%s355 + $0x30] sm:$0xff]
    %v363 = vld [vmem:[%s355 + $0x38] sm:$0xff]
    %v364 = vld [vmem:[%s355 + $0x40] sm:$0xff]
    %v365 = vld [vmem:[%s355 + $0x48] sm:$0xff]
    %v366 = vlaneseq
    %v367 = vshrl.u32 %v366, 7
    %v368 = vsub.s32 1, %v367
    %v369 = vrot.slane %v266, %v368
    %370 = vmatprep.subr.mxu0 0.0
    %371 = vmatpush1.msra.mxu0 0.0
    %372 = vmatprep.subr.mxu0 0.0
    %373 = vmatpush1.msra.mxu0 0.0
    %374 = vmatprep.subr.mxu0 0.0
    %375 = vmatpush1.msra.mxu0 0.0
    %376 = vmatprep.subr.mxu0 0.0
    %377 = vmatpush1.msra.mxu0 0.0
    %378 = vmatprep.subr.mxu0 0.0
    %379 = vmatpush1.msra.mxu0 0.0
    %380 = vmatprep.subr.mxu0 0.0
    %381 = vmatpush1.msra.mxu0 0.0
    %382 = vmatprep.subr.mxu0 0.0
    %383 = vmatpush1.msra.mxu0 %v365
    %384 = vmatprep.subr.mxu0 0.0
    %385 = vmatpush1.msra.mxu0 %v364
    %386 = vmatprep.subr.mxu0 0.0
    %387 = vmatpush1.msra.mxu0 %v363
    %388 = vmatprep.subr.mxu0 0.0
    %389 = vmatpush1.msra.mxu0 %v362
    %390 = vmatprep.subr.mxu0 0.0
    %391 = vmatpush1.msra.mxu0 %v361
    %392 = vmatprep.subr.mxu0 0.0
    %393 = vmatpush1.msra.mxu0 %v360
    %394 = vmatprep.subr.mxu0 0.0
    %395 = vmatpush1.msra.mxu0 %v359
    %396 = vmatprep.subr.mxu0 0.0
    %397 = vmatpush1.msra.mxu0 %v358
    %398 = vmatprep.subr.mxu0 0.0
    %399 = vmatpush1.msra.mxu0 %v357
    %400 = vmatprep.subr.mxu0 0.0
    %401 = vmatpush1.msra.mxu0 %v356
    %402 = vmatprep.subr.mxu0 0.0
    %403 = vmatpush2.msra.mxu0 0.0
    %404 = vmatprep.subr.mxu0 0.0
    %405 = vmatpush2.msra.mxu0 0.0
    %406 = vmatprep.subr.mxu0 0.0
    %407 = vmatpush2.msra.mxu0 0.0
    %408 = vmatprep.subr.mxu0 0.0
    %409 = vmatpush2.msra.mxu0 0.0
    %410 = vmatprep.subr.mxu0 0.0
    %411 = vmatpush2.msra.mxu0 0.0
    %412 = vmatprep.subr.mxu0 0.0
    %413 = vmatpush2.msra.mxu0 0.0
    %414 = vmatprep.subr.mxu0 0.0
    %415 = vmatpush2.msra.mxu0 0.0
    %416 = vmatprep.subr.mxu0 0.0
    %417 = vmatpush2.msra.mxu0 0.0
    %418 = vmatprep.subr.mxu0 0.0
    %419 = vmatpush2.msra.mxu0 0.0
    %420 = vmatprep.subr.mxu0 0.0
    %421 = vmatpush2.msra.mxu0 0.0
    %422 = vmatprep.subr.mxu0 0.0
    %423 = vmatpush2.msra.mxu0 0.0
    %424 = vmatprep.subr.mxu0 0.0
    %425 = vmatpush2.msra.mxu0 0.0
    %426 = vmatprep.subr.mxu0 0.0
    %427 = vmatpush2.msra.mxu0 0.0
    %428 = vmatprep.subr.mxu0 0.0
    %429 = vmatpush2.msra.mxu0 0.0
    %430 = vmatprep.subr.mxu0 0.0
    %431 = vmatpush2.msra.mxu0 0.0
    %432 = vmatprep.subr.mxu0 0.0
    %433 = vmatpush2.msra.mxu0 0.0
    %434 = vmatprep.mubr.f32.mxu0 0.0
    %435 = vmatmul.mubr.f32.gmra.mxu0 %v283
    %v436 = vpop.f32.mrf.mxu0
    %v437 = vadd.f32 %v369, %v436
    %v438 = vpop.f32.mrf.mxu0
    %439 = vdwg.mxu0
    %vm440 = vcmask 519168
    %v441 = vsel %vm440, %v352, 0.0
    %v442 = vrot.slane %v441, 4
    %v443 = vadd.f32 %v441, %v442
    %v444 = vrot.slane %v443, 2
    %v445 = vadd.f32 %v443, %v444
    %v446 = vrot.slane %v445, 1
    %v447 = vadd.f32 %v445, %v446
    %v448 = vmul.f32 %v447, %v207
    %v449 = vsub.f32 %v352, %v448
    %v450 = vmul.f32 %v449, %v449
    %v451 = vsel %vm440, %v450, 0.0
    %v452 = vrot.slane %v451, 4
    %v453 = vadd.f32 %v451, %v452
    %v454 = vrot.slane %v453, 2
    %v455 = vadd.f32 %v453, %v454
    %v456 = vrot.slane %v455, 1
    %v457 = vadd.f32 %v455, %v456
    %v458 = vmul.f32 %v457, %v207
    %v459 = vadd.f32 %v458, 1e-05
    %v460 = vrsqrt.pop %v459
    %v461 = vmul.f32 %v449, %v460
    %v462 = vlaneseq
    %v463 = vshrl.u32 %v462, 7
    %v464 = vsub.s32 2, %v463
    %v465 = vrot.slane %v266, %v464
    %v466 = vmul.f32 %v461, %v465
    %v467 = vlaneseq
    %v468 = vshrl.u32 %v467, 7
    %v469 = vsub.s32 4, %v468
    %v470 = vrot.slane %v266, %v469
    %v471 = vadd.f32 %v466, %v470
    %v472 = vmax.f32 %v471, 0.0
    %v473 = vsel %vm440, %v437, 0.0
    %v474 = vrot.slane %v473, 4
    %v475 = vadd.f32 %v473, %v474
    %v476 = vrot.slane %v475, 2
    %v477 = vadd.f32 %v475, %v476
    %v478 = vrot.slane %v477, 1
    %v479 = vadd.f32 %v477, %v478
    %v480 = vmul.f32 %v479, %v207
    %v481 = vsub.f32 %v437, %v480
    %v482 = vmul.f32 %v481, %v481
    %v483 = vsel %vm440, %v482, 0.0
    %v484 = vrot.slane %v483, 4
    %v485 = vadd.f32 %v483, %v484
    %v486 = vrot.slane %v485, 2
    %v487 = vadd.f32 %v485, %v486
    %v488 = vrot.slane %v487, 1
    %v489 = vadd.f32 %v487, %v488
    %v490 = vmul.f32 %v489, %v207
    %v491 = vadd.f32 %v490, 1e-05
    %v492 = vrsqrt.pop %v491
    %v493 = vmul.f32 %v481, %v492
    %v494 = vlaneseq
    %v495 = vshrl.u32 %v494, 7
    %v496 = vsub.s32 3, %v495
    %v497 = vrot.slane %v266, %v496
    %v498 = vmul.f32 %v493, %v497
    %v499 = vlaneseq
    %v500 = vshrl.u32 %v499, 7
    %v501 = vsub.s32 5, %v500
    %v502 = vrot.slane %v266, %v501
    %v503 = vadd.f32 %v498, %v502
    %v504 = vmax.f32 %v503, 0.0
    %v505 = vmax.f32 %v472, %v504
    %v506 = vld [vmem:[%s6] sm:$0x3f]
    %v507 = vld [vmem:[%s5] sm:$0xff]
    %v508 = vld [vmem:[%s5 + $0x8] sm:$0xff]
    %v509 = vld [vmem:[%s5 + $0x10] sm:$0xff]
    %v510 = vld [vmem:[%s5 + $0x18] sm:$0xff]
    %v511 = vld [vmem:[%s5 + $0x20] sm:$0xff]
    %v512 = vld [vmem:[%s5 + $0x28] sm:$0xff]
    %v513 = vld [vmem:[%s5 + $0x30] sm:$0xff]
    %v514 = vld [vmem:[%s5 + $0x38] sm:$0xff]
    %v515 = vlaneseq
    %v516 = vshrl.u32 %v515, 7
    %v517 = vsub.s32 0, %v516
    %v518 = vrot.slane %v506, %v517
    %vm519 = vcmask 523264
    %v521 = vsel %vm519, %v505, 0
    %523 = vmatprep.subr.mxu0 0.0
    %524 = vmatpush1.msra.mxu0 0.0
    %525 = vmatprep.subr.mxu0 0.0
    %526 = vmatpush1.msra.mxu0 0.0
    %527 = vmatprep.subr.mxu0 0.0
    %528 = vmatpush1.msra.mxu0 0.0
    %529 = vmatprep.subr.mxu0 0.0
    %530 = vmatpush1.msra.mxu0 0.0
    %531 = vmatprep.subr.mxu0 0.0
    %532 = vmatpush1.msra.mxu0 0.0
    %533 = vmatprep.subr.mxu0 0.0
    %534 = vmatpush1.msra.mxu0 0.0
    %535 = vmatprep.subr.mxu0 0.0
    %536 = vmatpush1.msra.mxu0 0.0
    %537 = vmatprep.subr.mxu0 0.0
    %538 = vmatpush1.msra.mxu0 0.0
    %539 = vmatprep.subr.mxu0 0.0
    %540 = vmatpush1.msra.mxu0 %v514
    %541 = vmatprep.subr.mxu0 0.0
    %542 = vmatpush1.msra.mxu0 %v513
    %543 = vmatprep.subr.mxu0 0.0
    %544 = vmatpush1.msra.mxu0 %v512
    %545 = vmatprep.subr.mxu0 0.0
    %546 = vmatpush1.msra.mxu0 %v511
    %547 = vmatprep.subr.mxu0 0.0
    %548 = vmatpush1.msra.mxu0 %v510
    %549 = vmatprep.subr.mxu0 0.0
    %550 = vmatpush1.msra.mxu0 %v509
    %551 = vmatprep.subr.mxu0 0.0
    %552 = vmatpush1.msra.mxu0 %v508
    %553 = vmatprep.subr.mxu0 0.0
    %554 = vmatpush1.msra.mxu0 %v507
    %555 = vmatprep.subr.mxu0 0.0
    %556 = vmatpush2.msra.mxu0 0.0
    %557 = vmatprep.subr.mxu0 0.0
    %558 = vmatpush2.msra.mxu0 0.0
    %559 = vmatprep.subr.mxu0 0.0
    %560 = vmatpush2.msra.mxu0 0.0
    %561 = vmatprep.subr.mxu0 0.0
    %562 = vmatpush2.msra.mxu0 0.0
    %563 = vmatprep.subr.mxu0 0.0
    %564 = vmatpush2.msra.mxu0 0.0
    %565 = vmatprep.subr.mxu0 0.0
    %566 = vmatpush2.msra.mxu0 0.0
    %567 = vmatprep.subr.mxu0 0.0
    %568 = vmatpush2.msra.mxu0 0.0
    %569 = vmatprep.subr.mxu0 0.0
    %570 = vmatpush2.msra.mxu0 0.0
    %571 = vmatprep.subr.mxu0 0.0
    %572 = vmatpush2.msra.mxu0 0.0
    %573 = vmatprep.subr.mxu0 0.0
    %574 = vmatpush2.msra.mxu0 0.0
    %575 = vmatprep.subr.mxu0 0.0
    %576 = vmatpush2.msra.mxu0 0.0
    %577 = vmatprep.subr.mxu0 0.0
    %578 = vmatpush2.msra.mxu0 0.0
    %579 = vmatprep.subr.mxu0 0.0
    %580 = vmatpush2.msra.mxu0 0.0
    %581 = vmatprep.subr.mxu0 0.0
    %582 = vmatpush2.msra.mxu0 0.0
    %583 = vmatprep.subr.mxu0 0.0
    %584 = vmatpush2.msra.mxu0 0.0
    %585 = vmatprep.subr.mxu0 0.0
    %586 = vmatpush2.msra.mxu0 0.0
    %587 = vmatprep.mubr.f32.mxu0 0.0
    %588 = vmatmul.mubr.f32.gmra.mxu0 %v521
    %v589 = vpop.f32.mrf.mxu0
    %v590 = vadd.f32 %v518, %v589
    %v591 = vpop.f32.mrf.mxu0
    %592 = vdwg.mxu0
    %s593 = scalar_lea.vmem %s5, 64
    %v594 = vld [vmem:[%s593] sm:$0xff]
    %v595 = vld [vmem:[%s593 + $0x8] sm:$0xff]
    %v596 = vld [vmem:[%s593 + $0x10] sm:$0xff]
    %v597 = vld [vmem:[%s593 + $0x18] sm:$0xff]
    %v598 = vld [vmem:[%s593 + $0x20] sm:$0xff]
    %v599 = vld [vmem:[%s593 + $0x28] sm:$0xff]
    %v600 = vld [vmem:[%s593 + $0x30] sm:$0xff]
    %v601 = vld [vmem:[%s593 + $0x38] sm:$0xff]
    %v602 = vlaneseq
    %v603 = vshrl.u32 %v602, 7
    %v604 = vsub.s32 1, %v603
    %v605 = vrot.slane %v506, %v604
    %606 = vmatprep.subr.mxu0 0.0
    %607 = vmatpush1.msra.mxu0 0.0
    %608 = vmatprep.subr.mxu0 0.0
    %609 = vmatpush1.msra.mxu0 0.0
    %610 = vmatprep.subr.mxu0 0.0
    %611 = vmatpush1.msra.mxu0 0.0
    %612 = vmatprep.subr.mxu0 0.0
    %613 = vmatpush1.msra.mxu0 0.0
    %614 = vmatprep.subr.mxu0 0.0
    %615 = vmatpush1.msra.mxu0 0.0
    %616 = vmatprep.subr.mxu0 0.0
    %617 = vmatpush1.msra.mxu0 0.0
    %618 = vmatprep.subr.mxu0 0.0
    %619 = vmatpush1.msra.mxu0 0.0
    %620 = vmatprep.subr.mxu0 0.0
    %621 = vmatpush1.msra.mxu0 0.0
    %622 = vmatprep.subr.mxu0 0.0
    %623 = vmatpush1.msra.mxu0 %v601
    %624 = vmatprep.subr.mxu0 0.0
    %625 = vmatpush1.msra.mxu0 %v600
    %626 = vmatprep.subr.mxu0 0.0
    %627 = vmatpush1.msra.mxu0 %v599
    %628 = vmatprep.subr.mxu0 0.0
    %629 = vmatpush1.msra.mxu0 %v598
    %630 = vmatprep.subr.mxu0 0.0
    %631 = vmatpush1.msra.mxu0 %v597
    %632 = vmatprep.subr.mxu0 0.0
    %633 = vmatpush1.msra.mxu0 %v596
    %634 = vmatprep.subr.mxu0 0.0
    %635 = vmatpush1.msra.mxu0 %v595
    %636 = vmatprep.subr.mxu0 0.0
    %637 = vmatpush1.msra.mxu0 %v594
    %638 = vmatprep.subr.mxu0 0.0
    %639 = vmatpush2.msra.mxu0 0.0
    %640 = vmatprep.subr.mxu0 0.0
    %641 = vmatpush2.msra.mxu0 0.0
    %642 = vmatprep.subr.mxu0 0.0
    %643 = vmatpush2.msra.mxu0 0.0
    %644 = vmatprep.subr.mxu0 0.0
    %645 = vmatpush2.msra.mxu0 0.0
    %646 = vmatprep.subr.mxu0 0.0
    %647 = vmatpush2.msra.mxu0 0.0
    %648 = vmatprep.subr.mxu0 0.0
    %649 = vmatpush2.msra.mxu0 0.0
    %650 = vmatprep.subr.mxu0 0.0
    %651 = vmatpush2.msra.mxu0 0.0
    %652 = vmatprep.subr.mxu0 0.0
    %653 = vmatpush2.msra.mxu0 0.0
    %654 = vmatprep.subr.mxu0 0.0
    %655 = vmatpush2.msra.mxu0 0.0
    %656 = vmatprep.subr.mxu0 0.0
    %657 = vmatpush2.msra.mxu0 0.0
    %658 = vmatprep.subr.mxu0 0.0
    %659 = vmatpush2.msra.mxu0 0.0
    %660 = vmatprep.subr.mxu0 0.0
    %661 = vmatpush2.msra.mxu0 0.0
    %662 = vmatprep.subr.mxu0 0.0
    %663 = vmatpush2.msra.mxu0 0.0
    %664 = vmatprep.subr.mxu0 0.0
    %665 = vmatpush2.msra.mxu0 0.0
    %666 = vmatprep.subr.mxu0 0.0
    %667 = vmatpush2.msra.mxu0 0.0
    %668 = vmatprep.subr.mxu0 0.0
    %669 = vmatpush2.msra.mxu0 0.0
    %670 = vmatprep.mubr.f32.mxu0 0.0
    %671 = vmatmul.mubr.f32.gmra.mxu0 %v521
    %v672 = vpop.f32.mrf.mxu0
    %v673 = vadd.f32 %v605, %v672
    %v674 = vpop.f32.mrf.mxu0
    %675 = vdwg.mxu0
    %v676 = vsel %vm440, %v590, 0.0
    %v677 = vrot.slane %v676, 4
    %v678 = vadd.f32 %v676, %v677
    %v679 = vrot.slane %v678, 2
    %v680 = vadd.f32 %v678, %v679
    %v681 = vrot.slane %v680, 1
    %v682 = vadd.f32 %v680, %v681
    %v683 = vmul.f32 %v682, %v207
    %v684 = vsub.f32 %v590, %v683
    %v685 = vmul.f32 %v684, %v684
    %v686 = vsel %vm440, %v685, 0.0
    %v687 = vrot.slane %v686, 4
    %v688 = vadd.f32 %v686, %v687
    %v689 = vrot.slane %v688, 2
    %v690 = vadd.f32 %v688, %v689
    %v691 = vrot.slane %v690, 1
    %v692 = vadd.f32 %v690, %v691
    %v693 = vmul.f32 %v692, %v207
    %v694 = vadd.f32 %v693, 1e-05
    %v695 = vrsqrt.pop %v694
    %v696 = vmul.f32 %v684, %v695
    %v697 = vlaneseq
    %v698 = vshrl.u32 %v697, 7
    %v699 = vsub.s32 2, %v698
    %v700 = vrot.slane %v506, %v699
    %v701 = vmul.f32 %v696, %v700
    %v702 = vlaneseq
    %v703 = vshrl.u32 %v702, 7
    %v704 = vsub.s32 4, %v703
    %v705 = vrot.slane %v506, %v704
    %v706 = vadd.f32 %v701, %v705
    %v707 = vmax.f32 %v706, 0.0
    %v708 = vsel %vm440, %v673, 0.0
    %v709 = vrot.slane %v708, 4
    %v710 = vadd.f32 %v708, %v709
    %v711 = vrot.slane %v710, 2
    %v712 = vadd.f32 %v710, %v711
    %v713 = vrot.slane %v712, 1
    %v714 = vadd.f32 %v712, %v713
    %v715 = vmul.f32 %v714, %v207
    %v716 = vsub.f32 %v673, %v715
    %v717 = vmul.f32 %v716, %v716
    %v718 = vsel %vm440, %v717, 0.0
    %v719 = vrot.slane %v718, 4
    %v720 = vadd.f32 %v718, %v719
    %v721 = vrot.slane %v720, 2
    %v722 = vadd.f32 %v720, %v721
    %v723 = vrot.slane %v722, 1
    %v724 = vadd.f32 %v722, %v723
    %v725 = vmul.f32 %v724, %v207
    %v726 = vadd.f32 %v725, 1e-05
    %v727 = vrsqrt.pop %v726
    %v728 = vmul.f32 %v716, %v727
    %v729 = vlaneseq
    %v730 = vshrl.u32 %v729, 7
    %v731 = vsub.s32 3, %v730
    %v732 = vrot.slane %v506, %v731
    %v733 = vmul.f32 %v728, %v732
    %v734 = vlaneseq
    %v735 = vshrl.u32 %v734, 7
    %v736 = vsub.s32 5, %v735
    %v737 = vrot.slane %v506, %v736
    %v738 = vadd.f32 %v733, %v737
    %v739 = vmax.f32 %v738, 0.0
    %v740 = vmax.f32 %v707, %v739
    %v741 = vld [vmem:[%s7] sm:$0xff]
    %v742 = vld [vmem:[%s7 + $0x8] sm:$0xff]
    %v743 = vld [vmem:[%s7 + $0x10] sm:$0xff]
    %v744 = vld [vmem:[%s7 + $0x18] sm:$0xff]
    %v745 = vld [vmem:[%s7 + $0x20] sm:$0xff]
    %v746 = vld [vmem:[%s7 + $0x28] sm:$0xff]
    %v747 = vld [vmem:[%s7 + $0x30] sm:$0xff]
    %v748 = vld [vmem:[%s7 + $0x38] sm:$0xff]
    %v749 = vld [vmem:[%s8] sm:$0x1]
    %v751 = vlaneseq
    %v752 = vshrl.u32 %v751, 7
    %v753 = vsub.s32 0, %v752
    %v754 = vrot.slane %v749, %v753
    %v757 = vsel %vm519, %v740, 0
    %759 = vmatprep.subr.mxu0 0.0
    %760 = vmatpush1.msra.mxu0 0.0
    %761 = vmatprep.subr.mxu0 0.0
    %762 = vmatpush1.msra.mxu0 0.0
    %763 = vmatprep.subr.mxu0 0.0
    %764 = vmatpush1.msra.mxu0 0.0
    %765 = vmatprep.subr.mxu0 0.0
    %766 = vmatpush1.msra.mxu0 0.0
    %767 = vmatprep.subr.mxu0 0.0
    %768 = vmatpush1.msra.mxu0 0.0
    %769 = vmatprep.subr.mxu0 0.0
    %770 = vmatpush1.msra.mxu0 0.0
    %771 = vmatprep.subr.mxu0 0.0
    %772 = vmatpush1.msra.mxu0 0.0
    %773 = vmatprep.subr.mxu0 0.0
    %774 = vmatpush1.msra.mxu0 0.0
    %775 = vmatprep.subr.mxu0 0.0
    %776 = vmatpush1.msra.mxu0 %v748
    %777 = vmatprep.subr.mxu0 0.0
    %778 = vmatpush1.msra.mxu0 %v747
    %779 = vmatprep.subr.mxu0 0.0
    %780 = vmatpush1.msra.mxu0 %v746
    %781 = vmatprep.subr.mxu0 0.0
    %782 = vmatpush1.msra.mxu0 %v745
    %783 = vmatprep.subr.mxu0 0.0
    %784 = vmatpush1.msra.mxu0 %v744
    %785 = vmatprep.subr.mxu0 0.0
    %786 = vmatpush1.msra.mxu0 %v743
    %787 = vmatprep.subr.mxu0 0.0
    %788 = vmatpush1.msra.mxu0 %v742
    %789 = vmatprep.subr.mxu0 0.0
    %790 = vmatpush1.msra.mxu0 %v741
    %791 = vmatprep.subr.mxu0 0.0
    %792 = vmatpush2.msra.mxu0 0.0
    %793 = vmatprep.subr.mxu0 0.0
    %794 = vmatpush2.msra.mxu0 0.0
    %795 = vmatprep.subr.mxu0 0.0
    %796 = vmatpush2.msra.mxu0 0.0
    %797 = vmatprep.subr.mxu0 0.0
    %798 = vmatpush2.msra.mxu0 0.0
    %799 = vmatprep.subr.mxu0 0.0
    %800 = vmatpush2.msra.mxu0 0.0
    %801 = vmatprep.subr.mxu0 0.0
    %802 = vmatpush2.msra.mxu0 0.0
    %803 = vmatprep.subr.mxu0 0.0
    %804 = vmatpush2.msra.mxu0 0.0
    %805 = vmatprep.subr.mxu0 0.0
    %806 = vmatpush2.msra.mxu0 0.0
    %807 = vmatprep.subr.mxu0 0.0
    %808 = vmatpush2.msra.mxu0 0.0
    %809 = vmatprep.subr.mxu0 0.0
    %810 = vmatpush2.msra.mxu0 0.0
    %811 = vmatprep.subr.mxu0 0.0
    %812 = vmatpush2.msra.mxu0 0.0
    %813 = vmatprep.subr.mxu0 0.0
    %814 = vmatpush2.msra.mxu0 0.0
    %815 = vmatprep.subr.mxu0 0.0
    %816 = vmatpush2.msra.mxu0 0.0
    %817 = vmatprep.subr.mxu0 0.0
    %818 = vmatpush2.msra.mxu0 0.0
    %819 = vmatprep.subr.mxu0 0.0
    %820 = vmatpush2.msra.mxu0 0.0
    %821 = vmatprep.subr.mxu0 0.0
    %822 = vmatpush2.msra.mxu0 0.0
    %823 = vmatprep.mubr.f32.mxu0 0.0
    %824 = vmatmul.mubr.f32.gmra.mxu0 %v757
    %v825 = vpop.f32.mrf.mxu0
    %v826 = vadd.f32 %v754, %v825
    %v827 = vpop.f32.mrf.mxu0
    %828 = vdwg.mxu0
    %829 = vst [vmem:[#allocation2] sm:$0xf] %v826
    // Predicated region
    $region38: #{tpu_custom_call.1} parent=1 // pred_check
      _
    $region39: #{tpu_custom_call.1} parent=1 // pred_check_branch
      %831 = sbr.rel (0) target = $region41
    $region40: #{tpu_custom_call.1} parent=1 // pred_region
      %s833 = ssub.s32 64, 64
      %834 = vsyncadd [#allocation3], %s833
      %s836 = sshll.u32 [#allocation2], 4
      %s837 = int_to_ptr.vmem [resolvable:$true] %s836
      %839 = dma.vmem_to_hbm [thread:$0]  %s837, 64, %s9, [#allocation3]
    $region41: #{tpu_custom_call.1} parent=1 // pred_fallthru
      _
    // Predicated region
    $region42: #{tpu_custom_call.1} parent=1 // pred_check
      _
    $region43: #{tpu_custom_call.1} parent=1 // pred_check_branch
      %841 = sbr.rel (0) target = $region45
    $region44: #{tpu_custom_call.1} parent=1 // pred_region
      %842 = dma.done [#allocation3], 64
    $region45: #{tpu_custom_call.1} parent=1 // pred_fallthru
      _
    %843 = vsyncpa [#allocation3], 1

</llo_original>
